<compile_context>
chip_gen: v6e
topology: v6e:2x2x1
jax: 0.10.0
libtpu: 0.0.40
codegen_flags: <defaults>
</compile_context>

<pallas_src>
import jax
import jax.numpy as jnp
from jax.experimental import pallas as pl
from jax.experimental.pallas import tpu as pltpu


def _round_up(x, m):
    return ((x + m - 1) // m) * m


def _ffn_kernel_single(x_ref, w1_ref, b1_ref, w2_ref, b2_ref, o_ref):
    # Entire hidden dim resident: one fused pass, no accumulator scratch.
    h = jnp.dot(x_ref[...], w1_ref[...], preferred_element_type=jnp.float32)
    h = jnp.maximum(h + b1_ref[...], 0.0)
    y = jnp.dot(h.astype(w2_ref.dtype), w2_ref[...],
                preferred_element_type=jnp.float32)
    o_ref[...] = (y + b2_ref[...]).astype(o_ref.dtype)


def _ffn_kernel_acc(x_ref, w1_ref, b1_ref, w2_ref, b2_ref, o_ref, acc_ref):
    # x_ref:  (tm, n_pad)     w1_ref: (n_pad, th)   b1_ref: (1, th)
    # w2_ref: (th, n_pad)     b2_ref: (1, n_pad)
    # o_ref:  (tm, n_pad)     acc_ref: (tm, n_pad) f32 scratch
    h_idx = pl.program_id(1)

    @pl.when(h_idx == 0)
    def _init():
        acc_ref[...] = jnp.zeros_like(acc_ref)

    h = jnp.dot(x_ref[...], w1_ref[...], preferred_element_type=jnp.float32)
    h = jnp.maximum(h + b1_ref[...], 0.0)
    acc_ref[...] += jnp.dot(h.astype(w2_ref.dtype), w2_ref[...],
                            preferred_element_type=jnp.float32)

    @pl.when(h_idx == pl.num_programs(1) - 1)
    def _finalize():
        o_ref[...] = (acc_ref[...] + b2_ref[...]).astype(o_ref.dtype)


def feed_forward(x, w1, b1, w2, b2, *, tm=256, th=512, compute_dtype=None):
    """x: (..., n_embd). Returns same shape/dtype as x (dropout = eval mode).

    tm: row tile (multiple of 16).  th: hidden-dim tile (multiple of 128).
    compute_dtype: optional operand dtype for the matmuls (e.g. jnp.bfloat16);
    accumulation, bias adds and ReLU always stay in f32.
    """
    orig_shape = x.shape
    out_dtype = x.dtype
    n_embd = orig_shape[-1]
    hidden = w1.shape[1]

    xm = x.reshape(-1, n_embd)
    M = xm.shape[0]

    # --- tile-size selection / padding -------------------------------------
    tm = _round_up(max(tm, 16), 16)                 # bf16 sublane packing
    th = _round_up(max(th, 128), 128)               # lane-aligned hidden tile

    n_pad = _round_up(n_embd, 128)                  # lane-dense feature dim
    tm_eff = min(tm, _round_up(M, 16))              # don't over-pad tiny M
    m_pad = _round_up(M, tm_eff)
    th_eff = min(th, _round_up(hidden, 128))
    hid_pad = _round_up(hidden, th_eff)
    n_htiles = hid_pad // th_eff
    n_mtiles = m_pad // tm_eff

    # Zero padding is neutral through both matmuls and the ReLU.
    xm_p = jnp.pad(xm, ((0, m_pad - M), (0, n_pad - n_embd)))
    w1_p = jnp.pad(w1, ((0, n_pad - n_embd), (0, hid_pad - hidden)))
    w2_p = jnp.pad(w2, ((0, hid_pad - hidden), (0, n_pad - n_embd)))
    b1_p = jnp.pad(b1.astype(jnp.float32).reshape(1, hidden),
                   ((0, 0), (0, hid_pad - hidden)))
    b2_p = jnp.pad(b2.astype(jnp.float32).reshape(1, n_embd),
                   ((0, 0), (0, n_pad - n_embd)))

    if compute_dtype is not None:
        xm_p = xm_p.astype(compute_dtype)
        w1_p = w1_p.astype(compute_dtype)
        w2_p = w2_p.astype(compute_dtype)

    single_pass = (n_htiles == 1)

    # --- VMEM budget (double-buffered inputs/outputs + f32 accumulator) ----
    isz = jnp.dtype(xm_p.dtype).itemsize
    osz = jnp.dtype(out_dtype).itemsize
    per_step = (tm_eff * n_pad * isz          # x tile
                + n_pad * th_eff * isz        # W1 slab
                + th_eff * 4                  # b1 slab (f32)
                + th_eff * n_pad * isz        # W2 slab
                + n_pad * 4                   # b2 (f32)
                + tm_eff * n_pad * osz)       # out tile
    vmem_needed = 2 * per_step
    if not single_pass:
        vmem_needed += tm_eff * n_pad * 4     # accumulator scratch
    vmem_limit = int(max(32 << 20, min(int(vmem_needed * 1.5), 100 << 20)))

    # Cost hint: x / b2 blocks are fetched once per row tile (index invariant
    # along the hidden axis), weight slabs once per row tile.
    flops = 2 * 2 * m_pad * n_pad * hid_pad           # two GEMMs
    bytes_accessed = (xm_p.size * isz
                      + (w1_p.size + w2_p.size) * isz * n_mtiles
                      + b1_p.size * 4 * n_mtiles + b2_p.size * 4 * n_mtiles
                      + m_pad * n_pad * osz)
    cost = pl.CostEstimate(flops=flops, transcendentals=0,
                           bytes_accessed=int(bytes_accessed))

    if single_pass:
        kernel = _ffn_kernel_single
        grid = (n_mtiles,)
        in_specs = [
            pl.BlockSpec((tm_eff, n_pad), lambda i: (i, 0)),   # x rows
            pl.BlockSpec((n_pad, th_eff), lambda i: (0, 0)),   # W1
            pl.BlockSpec((1, th_eff), lambda i: (0, 0)),       # b1
            pl.BlockSpec((th_eff, n_pad), lambda i: (0, 0)),   # W2
            pl.BlockSpec((1, n_pad), lambda i: (0, 0)),        # b2
        ]
        out_spec = pl.BlockSpec((tm_eff, n_pad), lambda i: (i, 0))
        scratch = []
        dim_sem = ("parallel",)
    else:
        kernel = _ffn_kernel_acc
        grid = (n_mtiles, n_htiles)
        in_specs = [
            pl.BlockSpec((tm_eff, n_pad), lambda i, h: (i, 0)),   # x rows
            pl.BlockSpec((n_pad, th_eff), lambda i, h: (0, h)),   # W1 slab
            pl.BlockSpec((1, th_eff), lambda i, h: (0, h)),       # b1 slab
            pl.BlockSpec((th_eff, n_pad), lambda i, h: (h, 0)),   # W2 slab
            pl.BlockSpec((1, n_pad), lambda i, h: (0, 0)),        # b2
        ]
        out_spec = pl.BlockSpec((tm_eff, n_pad), lambda i, h: (i, 0))
        scratch = [pltpu.VMEM((tm_eff, n_pad), jnp.float32)]
        dim_sem = ("parallel", "arbitrary")

    out = pl.pallas_call(
        kernel,
        out_shape=jax.ShapeDtypeStruct((m_pad, n_pad), out_dtype),
        grid_spec=pltpu.PrefetchScalarGridSpec(
            num_scalar_prefetch=0,
            grid=grid,
            in_specs=in_specs,
            out_specs=out_spec,
            scratch_shapes=scratch,
        ),
        compiler_params=pltpu.CompilerParams(
            dimension_semantics=dim_sem,
            vmem_limit_bytes=vmem_limit),
        cost_estimate=cost,
    )(xm_p, w1_p, b1_p, w2_p, b2_p)

    # TODO(synk): nn.Dropout is identity in eval mode; training-mode dropout
    # (with torch's RNG stream) is not reproduced here.
    return out[:M, :n_embd].reshape(orig_shape)


def init_params(key, n_embd):
    """Deterministic init mimicking torch.nn.Linear (uniform +/- 1/sqrt(fan_in))."""
    hidden = 4 * n_embd
    k1, k2, k3, k4 = jax.random.split(key, 4)
    lim1 = 1.0 / jnp.sqrt(n_embd)
    lim2 = 1.0 / jnp.sqrt(hidden)
    # stored as (in_features, out_features), i.e. torch weight transposed
    w1 = jax.random.uniform(k1, (n_embd, hidden), jnp.float32, -lim1, lim1)
    b1 = jax.random.uniform(k2, (hidden,), jnp.float32, -lim1, lim1)
    w2 = jax.random.uniform(k3, (hidden, n_embd), jnp.float32, -lim2, lim2)
    b2 = jax.random.uniform(k4, (n_embd,), jnp.float32, -lim2, lim2)
    return w1, b1, w2, b2


if __name__ == "__main__":
    key = jax.random.PRNGKey(0)
    B, T, n_embd = 2, 8, 32            # batch=2, seq=8, n_embd=32 (hidden=128)
    kx, kp = jax.random.split(key)
    x = jax.random.normal(kx, (B, T, n_embd), jnp.float32)
    w1, b1, w2, b2 = init_params(kp, n_embd)

    # f32-operand path (single-pass kernel at this size): tight check vs JAX.
    y = feed_forward(x, w1, b1, w2, b2)
    y = jax.block_until_ready(y)
    ref = jnp.maximum(x @ w1 + b1, 0.0) @ w2 + b2
    assert y.shape == x.shape and y.dtype == x.dtype
    assert jnp.allclose(y, ref, atol=1e-5, rtol=1e-5)

    # Multi hidden-tile (accumulator) path: force th=128 so grid[1] > 1 with a
    # larger hidden dim, check against plain JAX.
    n_embd2 = 64                        # hidden = 256 -> 2 hidden tiles at th=128
    x2 = jax.random.normal(jax.random.PRNGKey(1), (B, T, n_embd2), jnp.float32)
    w1b_, b1b_, w2b_, b2b_ = init_params(jax.random.PRNGKey(2), n_embd2)
    y2 = feed_forward(x2, w1b_, b1b_, w2b_, b2b_, th=128)
    y2 = jax.block_until_ready(y2)
    ref2 = jnp.maximum(x2 @ w1b_ + b1b_, 0.0) @ w2b_ + b2b_
    assert jnp.allclose(y2, ref2, atol=1e-5, rtol=1e-5)

    # bf16-operand path (f32 accumulation in-kernel): check vs bf16-cast ref.
    y_bf = feed_forward(x, w1, b1, w2, b2, compute_dtype=jnp.bfloat16)
    y_bf = jax.block_until_ready(y_bf)
    xb = x.astype(jnp.bfloat16).astype(jnp.float32)
    w1b = w1.astype(jnp.bfloat16).astype(jnp.float32)
    w2b = w2.astype(jnp.bfloat16).astype(jnp.float32)
    hb = jnp.maximum(xb @ w1b + b1, 0.0).astype(jnp.bfloat16).astype(jnp.float32)
    ref_bf = hb @ w2b + b2
    assert y_bf.shape == x.shape
    assert jnp.allclose(y_bf, ref_bf, atol=5e-3, rtol=5e-3)

    print("KERNEL_OK")
</pallas_src>

<mosaic_0001>
module attributes {stable_mosaic.version = 11 : i64} {
  func.func @_ffn_kernel_single(%arg0: i32, %arg1: memref<16x128xf32, #tpu.memory_space<vmem>>, %arg2: memref<128x128xf32, #tpu.memory_space<vmem>>, %arg3: memref<1x128xf32, #tpu.memory_space<vmem>>, %arg4: memref<128x128xf32, #tpu.memory_space<vmem>>, %arg5: memref<1x128xf32, #tpu.memory_space<vmem>>, %arg6: memref<16x128xf32, #tpu.memory_space<vmem>>) attributes {dimension_semantics = [#tpu.dimension_semantics<parallel>], iteration_bounds = array<i64: 1>, scalar_prefetch = 0 : i64, scratch_operands = 0 : i64, tpu.core_type = #tpu.core_type<tc>, window_params = [{transform_indices = @transform_0, window_bounds = array<i64: 16, 128>}, {pipeline_mode = #tpu.pipeline_mode<synchronous>, transform_indices = @transform_1, window_bounds = array<i64: 128, 128>}, {pipeline_mode = #tpu.pipeline_mode<synchronous>, transform_indices = @transform_2, window_bounds = array<i64: 1, 128>}, {pipeline_mode = #tpu.pipeline_mode<synchronous>, transform_indices = @transform_3, window_bounds = array<i64: 128, 128>}, {pipeline_mode = #tpu.pipeline_mode<synchronous>, transform_indices = @transform_4, window_bounds = array<i64: 1, 128>}, {transform_indices = @transform_5, window_bounds = array<i64: 16, 128>}]} {
    %c0 = arith.constant 0 : index
    %c0_0 = arith.constant 0 : index
    %0 = vector.load %arg1[%c0, %c0_0] : memref<16x128xf32, #tpu.memory_space<vmem>>, vector<16x128xf32>
    %c0_1 = arith.constant 0 : index
    %c0_2 = arith.constant 0 : index
    %1 = vector.load %arg2[%c0_1, %c0_2] : memref<128x128xf32, #tpu.memory_space<vmem>>, vector<128x128xf32>
    %cst = arith.constant dense<0.000000e+00> : vector<16x128xf32>
    %2 = tpu.matmul %0, %1, %cst {dimension_numbers = #tpu.dot_dimension_numbers<[1], [0], [0], [1], [0, 0, 1, 1], [], []>} : vector<16x128xf32>, vector<128x128xf32>, vector<16x128xf32> -> vector<16x128xf32>
    %c0_3 = arith.constant 0 : index
    %c0_4 = arith.constant 0 : index
    %3 = vector.load %arg3[%c0_3, %c0_4] : memref<1x128xf32, #tpu.memory_space<vmem>>, vector<1x128xf32>
    %4 = vector.broadcast %3 : vector<1x128xf32> to vector<16x128xf32>
    %5 = arith.addf %2, %4 : vector<16x128xf32>
    %cst_5 = arith.constant 0.000000e+00 : f32
    %6 = vector.broadcast %cst_5 : f32 to vector<16x128xf32>
    %7 = arith.maximumf %5, %6 : vector<16x128xf32>
    %c0_6 = arith.constant 0 : index
    %c0_7 = arith.constant 0 : index
    %8 = vector.load %arg4[%c0_6, %c0_7] : memref<128x128xf32, #tpu.memory_space<vmem>>, vector<128x128xf32>
    %cst_8 = arith.constant dense<0.000000e+00> : vector<16x128xf32>
    %9 = tpu.matmul %7, %8, %cst_8 {dimension_numbers = #tpu.dot_dimension_numbers<[1], [0], [0], [1], [0, 0, 1, 1], [], []>} : vector<16x128xf32>, vector<128x128xf32>, vector<16x128xf32> -> vector<16x128xf32>
    %c0_9 = arith.constant 0 : index
    %c0_10 = arith.constant 0 : index
    %10 = vector.load %arg5[%c0_9, %c0_10] : memref<1x128xf32, #tpu.memory_space<vmem>>, vector<1x128xf32>
    %11 = vector.broadcast %10 : vector<1x128xf32> to vector<16x128xf32>
    %12 = arith.addf %9, %11 : vector<16x128xf32>
    %c0_11 = arith.constant 0 : index
    %c0_12 = arith.constant 0 : index
    %13 = vector.load %arg6[%c0_11, %c0_12] : memref<16x128xf32, #tpu.memory_space<vmem>>, vector<16x128xf32>
    tpu.vector_store %arg6[%c0_11, %c0_12], %12 {strides = array<i32>} : memref<16x128xf32, #tpu.memory_space<vmem>>, vector<16x128xf32>,
    return
  }
  func.func @transform_0(%arg0: i32) -> (i32, i32) {
    %c0_i32 = arith.constant 0 : i32
    %c0_i32_0 = arith.constant 0 : i32
    return %arg0, %c0_i32 : i32, i32
  }
  func.func @transform_1(%arg0: i32) -> (i32, i32) {
    %c0_i32 = arith.constant 0 : i32
    %c0_i32_0 = arith.constant 0 : i32
    %c0_i32_1 = arith.constant 0 : i32
    return %c0_i32, %c0_i32_0 : i32, i32
  }
  func.func @transform_2(%arg0: i32) -> (i32, i32) {
    %c0_i32 = arith.constant 0 : i32
    %c0_i32_0 = arith.constant 0 : i32
    %c0_i32_1 = arith.constant 0 : i32
    return %c0_i32, %c0_i32_0 : i32, i32
  }
  func.func @transform_3(%arg0: i32) -> (i32, i32) {
    %c0_i32 = arith.constant 0 : i32
    %c0_i32_0 = arith.constant 0 : i32
    %c0_i32_1 = arith.constant 0 : i32
    return %c0_i32, %c0_i32_0 : i32, i32
  }
  func.func @transform_4(%arg0: i32) -> (i32, i32) {
    %c0_i32 = arith.constant 0 : i32
    %c0_i32_0 = arith.constant 0 : i32
    %c0_i32_1 = arith.constant 0 : i32
    return %c0_i32, %c0_i32_0 : i32, i32
  }
  func.func @transform_5(%arg0: i32) -> (i32, i32) {
    %c0_i32 = arith.constant 0 : i32
    %c0_i32_0 = arith.constant 0 : i32
    return %arg0, %c0_i32 : i32, i32
  }
}

</mosaic_0001>

<llo_original>
// kernel: tpu_custom_call.1
$region0: #{tpu_custom_call.1}
  #allocation0 [shape = 'u32[]', space=smem, size = 0x4, offset = 0x4, fixed_abs, tag = 'smem constant byte address 0x4 - core index']
  #allocation1 [shape = 'u32[144,128]{1,0:T(1,128)}', space=vmem, size = 0x12000, scoped, tag = 'internal scratch']
  %s0 = inlined_call_operand.hbm [shape: f32[16,128], index: 0, kind: input, shape index: {}]
  %s1 = inlined_call_operand.hbm [shape: f32[128,128], index: 1, kind: input, shape index: {}]
  %s2 = inlined_call_operand.vmem [shape: f32[1,128], index: 2, kind: input, shape index: {}]
  %s3 = inlined_call_operand.hbm [shape: f32[128,128], index: 3, kind: input, shape index: {}]
  %s4 = inlined_call_operand.vmem [shape: f32[1,128], index: 4, kind: input, shape index: {}]
  %s5 = inlined_call_operand.hbm [shape: f32[16,128], index: 5, kind: output, shape index: {}]
  %s6 = sld [smem:[#allocation0]]
  $region42: #{tpu_custom_call.1} parent=0
    _
  %s8 = ssub.s32 1, %s6
  %s9 = scalar_select 0, %s8, %s6
  $region1: #{tpu_custom_call.1} parent=0
    #allocation2 [shape = 'u8[8192]{0}', space=vmem, size = 0x2000, scoped, tag = 'input window, operand 0, single buffered']
    #allocation3 [shape = 's32[1]{0}', space=sflag, size = 0x4, scoped, tag = 'scoped memory for tpu_custom_call.1']
    #allocation4 [shape = 's32[1]{0}', space=sflag, size = 0x4, scoped, tag = 'scoped memory for tpu_custom_call.1']
    #allocation5 [shape = 'u8[65536]{0}', space=vmem, size = 0x10000, scoped, tag = 'input window, operand 1, single buffered']
    #allocation6 [shape = 's32[1]{0}', space=sflag, size = 0x4, scoped, tag = 'scoped memory for tpu_custom_call.1']
    #allocation7 [shape = 'u8[65536]{0}', space=vmem, size = 0x10000, scoped, tag = 'input window, operand 3, single buffered']
    #allocation8 [shape = 'u8[8192]{0}', space=vmem, size = 0x2000, scoped, tag = 'output window, operand 0, single buffered']
    %10 = vsyncpa [#allocation3], 0
    %11 = vsyncpa [#allocation6], 0
    %12 = vsyncpa [#allocation4], 0
    // Predicated region
    $region2: #{tpu_custom_call.1} parent=1 // pred_check
      _
    $region3: #{tpu_custom_call.1} parent=1 // pred_check_branch
      %14 = sbr.rel (0) target = $region5
    $region4: #{tpu_custom_call.1} parent=1 // pred_region
      %s16 = ssub.s32 256, 256
      %17 = vsyncadd [#allocation3], %s16
      %s18 = sshll.u32 [#allocation2], 4
      %s19 = int_to_ptr.vmem [resolvable:$true] %s18
      %24 = dma.hbm_to_vmem [thread:$0]  %s0, 256, %s19, [#allocation3], 128, 128, 8
    $region5: #{tpu_custom_call.1} parent=1 // pred_fallthru
      _
    // Predicated region
    $region6: #{tpu_custom_call.1} parent=1 // pred_check
      _
    $region7: #{tpu_custom_call.1} parent=1 // pred_check_branch
      %26 = sbr.rel (0) target = $region9
    $region8: #{tpu_custom_call.1} parent=1 // pred_region
      %s28 = ssub.s32 2048, 2048
      %29 = vsyncadd [#allocation6], %s28
      %s30 = sshll.u32 [#allocation5], 4
      %s31 = int_to_ptr.vmem [resolvable:$true] %s30
      %36 = dma.hbm_to_vmem [thread:$0]  %s1, 2048, %s31, [#allocation6], 128, 128, 8
    $region9: #{tpu_custom_call.1} parent=1 // pred_fallthru
      _
    // Predicated region
    $region10: #{tpu_custom_call.1} parent=1 // pred_check
      _
    $region11: #{tpu_custom_call.1} parent=1 // pred_check_branch
      %38 = sbr.rel (0) target = $region13
    $region12: #{tpu_custom_call.1} parent=1 // pred_region
      _
    $region13: #{tpu_custom_call.1} parent=1 // pred_fallthru
      _
    // Predicated region
    $region14: #{tpu_custom_call.1} parent=1 // pred_check
      _
    $region15: #{tpu_custom_call.1} parent=1 // pred_check_branch
      %40 = sbr.rel (0) target = $region17
    $region16: #{tpu_custom_call.1} parent=1 // pred_region
      %s42 = ssub.s32 2048, 2048
      %43 = vsyncadd [#allocation6], %s42
      %s44 = sshll.u32 [#allocation7], 4
      %s45 = int_to_ptr.vmem [resolvable:$true] %s44
      %50 = dma.hbm_to_vmem [thread:$0]  %s3, 2048, %s45, [#allocation6], 128, 128, 8
    $region17: #{tpu_custom_call.1} parent=1 // pred_fallthru
      _
    // Predicated region
    $region18: #{tpu_custom_call.1} parent=1 // pred_check
      _
    $region19: #{tpu_custom_call.1} parent=1 // pred_check_branch
      %52 = sbr.rel (0) target = $region21
    $region20: #{tpu_custom_call.1} parent=1 // pred_region
      _
    $region21: #{tpu_custom_call.1} parent=1 // pred_fallthru
      _
    // Predicated region
    $region22: #{tpu_custom_call.1} parent=1 // pred_check
      _
    $region23: #{tpu_custom_call.1} parent=1 // pred_check_branch
      %54 = sbr.rel (0) target = $region25
    $region24: #{tpu_custom_call.1} parent=1 // pred_region
      %55 = dma.done [#allocation3], 256
    $region25: #{tpu_custom_call.1} parent=1 // pred_fallthru
      _
    // Predicated region
    $region26: #{tpu_custom_call.1} parent=1 // pred_check
      _
    $region27: #{tpu_custom_call.1} parent=1 // pred_check_branch
      %57 = sbr.rel (0) target = $region29
    $region28: #{tpu_custom_call.1} parent=1 // pred_region
      %58 = dma.done [#allocation6], 2048
    $region29: #{tpu_custom_call.1} parent=1 // pred_fallthru
      _
    // Predicated region
    $region30: #{tpu_custom_call.1} parent=1 // pred_check
      _
    $region31: #{tpu_custom_call.1} parent=1 // pred_check_branch
      %60 = sbr.rel (0) target = $region33
    $region32: #{tpu_custom_call.1} parent=1 // pred_region
      %61 = dma.done [#allocation6], 2048
    $region33: #{tpu_custom_call.1} parent=1 // pred_fallthru
      _
    %v62 = vld [vmem:[#allocation2] sm:$0xff]
    %v63 = vld [vmem:[#allocation2 + $0x8] sm:$0xff]
    %v64 = vld [vmem:[#allocation5] sm:$0xff]
    %v65 = vld [vmem:[#allocation5 + $0x8] sm:$0xff]
    %v66 = vld [vmem:[#allocation5 + $0x10] sm:$0xff]
    %v67 = vld [vmem:[#allocation5 + $0x18] sm:$0xff]
    %v68 = vld [vmem:[#allocation5 + $0x20] sm:$0xff]
    %v69 = vld [vmem:[#allocation5 + $0x28] sm:$0xff]
    %v70 = vld [vmem:[#allocation5 + $0x30] sm:$0xff]
    %v71 = vld [vmem:[#allocation5 + $0x38] sm:$0xff]
    %v72 = vld [vmem:[#allocation5 + $0x40] sm:$0xff]
    %v73 = vld [vmem:[#allocation5 + $0x48] sm:$0xff]
    %v74 = vld [vmem:[#allocation5 + $0x50] sm:$0xff]
    %v75 = vld [vmem:[#allocation5 + $0x58] sm:$0xff]
    %v76 = vld [vmem:[#allocation5 + $0x60] sm:$0xff]
    %v77 = vld [vmem:[#allocation5 + $0x68] sm:$0xff]
    %v78 = vld [vmem:[#allocation5 + $0x70] sm:$0xff]
    %v79 = vld [vmem:[#allocation5 + $0x78] sm:$0xff]
    %v80 = vld [vmem:[%s2] sm:$0x1]
    %v82 = vlaneseq
    %v83 = vshrl.u32 %v82, 7
    %v84 = vsub.s32 0, %v83
    %v85 = vrot.slane %v80, %v84
    %87 = vmatprep.subr.mxu0 0.0
    %88 = vmatpush1.msra.mxu0 %v79
    %89 = vmatprep.subr.mxu0 0.0
    %90 = vmatpush1.msra.mxu0 %v78
    %91 = vmatprep.subr.mxu0 0.0
    %92 = vmatpush1.msra.mxu0 %v77
    %93 = vmatprep.subr.mxu0 0.0
    %94 = vmatpush1.msra.mxu0 %v76
    %95 = vmatprep.subr.mxu0 0.0
    %96 = vmatpush1.msra.mxu0 %v75
    %97 = vmatprep.subr.mxu0 0.0
    %98 = vmatpush1.msra.mxu0 %v74
    %99 = vmatprep.subr.mxu0 0.0
    %100 = vmatpush1.msra.mxu0 %v73
    %101 = vmatprep.subr.mxu0 0.0
    %102 = vmatpush1.msra.mxu0 %v72
    %103 = vmatprep.subr.mxu0 0.0
    %104 = vmatpush1.msra.mxu0 %v71
    %105 = vmatprep.subr.mxu0 0.0
    %106 = vmatpush1.msra.mxu0 %v70
    %107 = vmatprep.subr.mxu0 0.0
    %108 = vmatpush1.msra.mxu0 %v69
    %109 = vmatprep.subr.mxu0 0.0
    %110 = vmatpush1.msra.mxu0 %v68
    %111 = vmatprep.subr.mxu0 0.0
    %112 = vmatpush1.msra.mxu0 %v67
    %113 = vmatprep.subr.mxu0 0.0
    %114 = vmatpush1.msra.mxu0 %v66
    %115 = vmatprep.subr.mxu0 0.0
    %116 = vmatpush1.msra.mxu0 %v65
    %117 = vmatprep.subr.mxu0 0.0
    %118 = vmatpush1.msra.mxu0 %v64
    %119 = vmatprep.subr.mxu0 0.0
    %120 = vmatpush2.msra.mxu0 0.0
    %121 = vmatprep.subr.mxu0 0.0
    %122 = vmatpush2.msra.mxu0 0.0
    %123 = vmatprep.subr.mxu0 0.0
    %124 = vmatpush2.msra.mxu0 0.0
    %125 = vmatprep.subr.mxu0 0.0
    %126 = vmatpush2.msra.mxu0 0.0
    %127 = vmatprep.subr.mxu0 0.0
    %128 = vmatpush2.msra.mxu0 0.0
    %129 = vmatprep.subr.mxu0 0.0
    %130 = vmatpush2.msra.mxu0 0.0
    %131 = vmatprep.subr.mxu0 0.0
    %132 = vmatpush2.msra.mxu0 0.0
    %133 = vmatprep.subr.mxu0 0.0
    %134 = vmatpush2.msra.mxu0 0.0
    %135 = vmatprep.subr.mxu0 0.0
    %136 = vmatpush2.msra.mxu0 0.0
    %137 = vmatprep.subr.mxu0 0.0
    %138 = vmatpush2.msra.mxu0 0.0
    %139 = vmatprep.subr.mxu0 0.0
    %140 = vmatpush2.msra.mxu0 0.0
    %141 = vmatprep.subr.mxu0 0.0
    %142 = vmatpush2.msra.mxu0 0.0
    %143 = vmatprep.subr.mxu0 0.0
    %144 = vmatpush2.msra.mxu0 0.0
    %145 = vmatprep.subr.mxu0 0.0
    %146 = vmatpush2.msra.mxu0 0.0
    %147 = vmatprep.subr.mxu0 0.0
    %148 = vmatpush2.msra.mxu0 0.0
    %149 = vmatprep.subr.mxu0 0.0
    %150 = vmatpush2.msra.mxu0 0.0
    %151 = vmatprep.mubr.f32.mxu0 0.0
    %152 = vmatmul.mubr.f32.gmra.mxu0 %v62
    %v153 = vpop.f32.mrf.mxu0
    %v154 = vadd.f32 %v85, %v153
    %v155 = vpop.f32.mrf.mxu0
    %156 = vmatprep.mubr.f32.mxu0 0.0
    %157 = vmatmul.mubr.f32.gmra.mxu0 %v63
    %v158 = vpop.f32.mrf.mxu0
    %v159 = vadd.f32 %v85, %v158
    %v160 = vpop.f32.mrf.mxu0
    %161 = vdwg.mxu0
    %v162 = vmax.f32 %v154, 0.0
    %v163 = vmax.f32 %v159, 0.0
    %v164 = vld [vmem:[#allocation7] sm:$0xff]
    %v165 = vld [vmem:[#allocation7 + $0x8] sm:$0xff]
    %v166 = vld [vmem:[#allocation7 + $0x10] sm:$0xff]
    %v167 = vld [vmem:[#allocation7 + $0x18] sm:$0xff]
    %v168 = vld [vmem:[#allocation7 + $0x20] sm:$0xff]
    %v169 = vld [vmem:[#allocation7 + $0x28] sm:$0xff]
    %v170 = vld [vmem:[#allocation7 + $0x30] sm:$0xff]
    %v171 = vld [vmem:[#allocation7 + $0x38] sm:$0xff]
    %v172 = vld [vmem:[#allocation7 + $0x40] sm:$0xff]
    %v173 = vld [vmem:[#allocation7 + $0x48] sm:$0xff]
    %v174 = vld [vmem:[#allocation7 + $0x50] sm:$0xff]
    %v175 = vld [vmem:[#allocation7 + $0x58] sm:$0xff]
    %v176 = vld [vmem:[#allocation7 + $0x60] sm:$0xff]
    %v177 = vld [vmem:[#allocation7 + $0x68] sm:$0xff]
    %v178 = vld [vmem:[#allocation7 + $0x70] sm:$0xff]
    %v179 = vld [vmem:[#allocation7 + $0x78] sm:$0xff]
    %v180 = vld [vmem:[%s4] sm:$0x1]
    %v182 = vlaneseq
    %v183 = vshrl.u32 %v182, 7
    %v184 = vsub.s32 0, %v183
    %v185 = vrot.slane %v180, %v184
    %187 = vmatprep.subr.mxu0 0.0
    %188 = vmatpush1.msra.mxu0 %v179
    %189 = vmatprep.subr.mxu0 0.0
    %190 = vmatpush1.msra.mxu0 %v178
    %191 = vmatprep.subr.mxu0 0.0
    %192 = vmatpush1.msra.mxu0 %v177
    %193 = vmatprep.subr.mxu0 0.0
    %194 = vmatpush1.msra.mxu0 %v176
    %195 = vmatprep.subr.mxu0 0.0
    %196 = vmatpush1.msra.mxu0 %v175
    %197 = vmatprep.subr.mxu0 0.0
    %198 = vmatpush1.msra.mxu0 %v174
    %199 = vmatprep.subr.mxu0 0.0
    %200 = vmatpush1.msra.mxu0 %v173
    %201 = vmatprep.subr.mxu0 0.0
    %202 = vmatpush1.msra.mxu0 %v172
    %203 = vmatprep.subr.mxu0 0.0
    %204 = vmatpush1.msra.mxu0 %v171
    %205 = vmatprep.subr.mxu0 0.0
    %206 = vmatpush1.msra.mxu0 %v170
    %207 = vmatprep.subr.mxu0 0.0
    %208 = vmatpush1.msra.mxu0 %v169
    %209 = vmatprep.subr.mxu0 0.0
    %210 = vmatpush1.msra.mxu0 %v168
    %211 = vmatprep.subr.mxu0 0.0
    %212 = vmatpush1.msra.mxu0 %v167
    %213 = vmatprep.subr.mxu0 0.0
    %214 = vmatpush1.msra.mxu0 %v166
    %215 = vmatprep.subr.mxu0 0.0
    %216 = vmatpush1.msra.mxu0 %v165
    %217 = vmatprep.subr.mxu0 0.0
    %218 = vmatpush1.msra.mxu0 %v164
    %219 = vmatprep.subr.mxu0 0.0
    %220 = vmatpush2.msra.mxu0 0.0
    %221 = vmatprep.subr.mxu0 0.0
    %222 = vmatpush2.msra.mxu0 0.0
    %223 = vmatprep.subr.mxu0 0.0
    %224 = vmatpush2.msra.mxu0 0.0
    %225 = vmatprep.subr.mxu0 0.0
    %226 = vmatpush2.msra.mxu0 0.0
    %227 = vmatprep.subr.mxu0 0.0
    %228 = vmatpush2.msra.mxu0 0.0
    %229 = vmatprep.subr.mxu0 0.0
    %230 = vmatpush2.msra.mxu0 0.0
    %231 = vmatprep.subr.mxu0 0.0
    %232 = vmatpush2.msra.mxu0 0.0
    %233 = vmatprep.subr.mxu0 0.0
    %234 = vmatpush2.msra.mxu0 0.0
    %235 = vmatprep.subr.mxu0 0.0
    %236 = vmatpush2.msra.mxu0 0.0
    %237 = vmatprep.subr.mxu0 0.0
    %238 = vmatpush2.msra.mxu0 0.0
    %239 = vmatprep.subr.mxu0 0.0
    %240 = vmatpush2.msra.mxu0 0.0
    %241 = vmatprep.subr.mxu0 0.0
    %242 = vmatpush2.msra.mxu0 0.0
    %243 = vmatprep.subr.mxu0 0.0
    %244 = vmatpush2.msra.mxu0 0.0
    %245 = vmatprep.subr.mxu0 0.0
    %246 = vmatpush2.msra.mxu0 0.0
    %247 = vmatprep.subr.mxu0 0.0
    %248 = vmatpush2.msra.mxu0 0.0
    %249 = vmatprep.subr.mxu0 0.0
    %250 = vmatpush2.msra.mxu0 0.0
    %251 = vmatprep.mubr.f32.mxu0 0.0
    %252 = vmatmul.mubr.f32.gmra.mxu0 %v162
    %v253 = vpop.f32.mrf.mxu0
    %v254 = vadd.f32 %v185, %v253
    %v255 = vpop.f32.mrf.mxu0
    %256 = vmatprep.mubr.f32.mxu0 0.0
    %257 = vmatmul.mubr.f32.gmra.mxu0 %v163
    %v258 = vpop.f32.mrf.mxu0
    %v259 = vadd.f32 %v185, %v258
    %v260 = vpop.f32.mrf.mxu0
    %261 = vdwg.mxu0
    %262 = vst [vmem:[#allocation8] sm:$0xff] %v254
    %263 = vst [vmem:[#allocation8 + $0x8] sm:$0xff] %v259
    // Predicated region
    $region34: #{tpu_custom_call.1} parent=1 // pred_check
      _
    $region35: #{tpu_custom_call.1} parent=1 // pred_check_branch
      %265 = sbr.rel (0) target = $region37
    $region36: #{tpu_custom_call.1} parent=1 // pred_region
      %s267 = ssub.s32 256, 256
      %268 = vsyncadd [#allocation4], %s267
      %s269 = sshll.u32 [#allocation8], 4
      %s270 = int_to_ptr.vmem [resolvable:$true] %s269
      %275 = dma.vmem_to_hbm [thread:$0]  %s270, 256, %s5, [#allocation4], 128, 128, 8
    $region37: #{tpu_custom_call.1} parent=1 // pred_fallthru
      _
    // Predicated region
    $region38: #{tpu_custom_call.1} parent=1 // pred_check
      _
    $region39: #{tpu_custom_call.1} parent=1 // pred_check_branch
      %277 = sbr.rel (0) target = $region41
    $region40: #{tpu_custom_call.1} parent=1 // pred_region
      %278 = dma.done [#allocation4], 256
    $region41: #{tpu_custom_call.1} parent=1 // pred_fallthru
      _
    %279 = vsyncpa [#allocation3], 1
    %280 = vsyncpa [#allocation6], 1
    %281 = vsyncpa [#allocation4], 1

</llo_original>
